<compile_context>
chip_gen: v6e
topology: v6e:2x2x1
jax: 0.10.0
libtpu: 0.0.40
codegen_flags: <defaults>
</compile_context>

<pallas_src>
import jax
import jax.numpy as jnp
from jax.experimental import pallas as pl
from jax.experimental.pallas import tpu as pltpu


def _label_embed_kernel(labels_ref, table_ref, out_ref):
    # labels_ref: VMEM (TB, 1) int32 effective labels (drop already applied)
    # table_ref:  VMEM (V, H)   full embedding table (resident, const index_map)
    # out_ref:    VMEM (TB, H)  output tile for this grid step
    tb = out_ref.shape[0]
    v = table_ref.shape[0]
    class_ids = jax.lax.broadcasted_iota(jnp.int32, (tb, v), 1)
    onehot = (labels_ref[...] == class_ids).astype(table_ref.dtype)   # (TB, V)
    out_ref[...] = jnp.dot(
        onehot, table_ref[...], preferred_element_type=jnp.float32
    ).astype(out_ref.dtype)


def label_embed_pallas(eff_labels, table):
    """Gather table[eff_labels] -> (B, H) via one-hot MXU matmul."""
    B = eff_labels.shape[0]
    V, H = table.shape

    # Rows per grid step: multiple of 8 sublanes, capped at 128.
    tb = min(128, pl.cdiv(B, 8) * 8)
    Bp = pl.cdiv(B, tb) * tb

    labels2d = eff_labels.astype(jnp.int32).reshape(B, 1)
    if Bp != B:
        labels2d = jnp.pad(labels2d, ((0, Bp - B), (0, 0)))  # pad rows sliced off

    out = pl.pallas_call(
        _label_embed_kernel,
        out_shape=jax.ShapeDtypeStruct((Bp, H), table.dtype),
        grid=(Bp // tb,),
        in_specs=[
            pl.BlockSpec((tb, 1), lambda i: (i, 0)),
            # Full table resident in VMEM: constant block index -> fetched
            # once, reused on every grid step.
            pl.BlockSpec((V, H), lambda i: (0, 0)),
        ],
        out_specs=pl.BlockSpec((tb, H), lambda i: (i, 0)),
        compiler_params=pltpu.CompilerParams(
            dimension_semantics=("parallel",)),
    )(labels2d, table)
    return out[:B]


def label_embedder_forward(table, num_classes, dropout_prob, labels, train,
                           force_drop_ids=None, rng=None):
    """Mirrors LabelEmbedder.forward semantics (token_drop fused in wrapper)."""
    B = labels.shape[0]
    labels = labels.astype(jnp.int32)
    use_dropout = dropout_prob > 0
    if (train and use_dropout) or (force_drop_ids is not None):
        if force_drop_ids is None:
            drop_ids = jax.random.uniform(rng, (B,)) < dropout_prob
        else:
            drop_ids = force_drop_ids == 1
        eff_labels = jnp.where(drop_ids, num_classes, labels)
    else:
        eff_labels = labels
    return label_embed_pallas(eff_labels, table)


if __name__ == "__main__":
    num_classes = 10
    hidden_size = 32
    dropout_prob = 0.1          # > 0  =>  use_cfg_embedding = 1 extra row
    B = 8

    key = jax.random.PRNGKey(0)
    k_table, k_labels, k_drop = jax.random.split(key, 3)

    # Deterministic "nn.Embedding" weights: (num_classes + 1, hidden_size).
    table = (jax.random.normal(k_table, (num_classes + 1, hidden_size),
                               jnp.float32) * 0.02)
    labels = jax.random.randint(k_labels, (B,), 0, num_classes, jnp.int32)

    # Forward pass (train=True exercises the token-drop path).
    emb = label_embedder_forward(table, num_classes, dropout_prob, labels,
                                 train=True, rng=k_drop)
    emb = jax.block_until_ready(emb)

    # Pure-JAX reference (same RNG stream as the wrapper).
    drop_ref = jax.random.uniform(k_drop, (B,)) < dropout_prob
    eff_labels = jnp.where(drop_ref, num_classes, labels)
    ref = table[eff_labels]

    assert emb.shape == (B, hidden_size)
    assert emb.dtype == jnp.float32
    assert jnp.allclose(emb, ref), "Pallas embedding lookup mismatch"

    # force_drop_ids path (all dropped -> CFG row).
    force = jnp.ones((B,), jnp.int32)
    emb_cfg = jax.block_until_ready(
        label_embedder_forward(table, num_classes, dropout_prob, labels,
                               train=False, force_drop_ids=force))
    assert jnp.allclose(emb_cfg, jnp.broadcast_to(table[num_classes],
                                                  (B, hidden_size)))

    # Non-multiple-of-8 batch (exercises padding), eval mode (no drop).
    labels5 = labels[:5]
    emb5 = jax.block_until_ready(
        label_embedder_forward(table, num_classes, dropout_prob, labels5,
                               train=False))
    assert emb5.shape == (5, hidden_size)
    assert jnp.allclose(emb5, table[labels5])

    print("KERNEL_OK")
</pallas_src>

<mosaic_0001>
module attributes {stable_mosaic.version = 11 : i64} {
  func.func @_label_embed_kernel(%arg0: i32, %arg1: memref<8x1xi32, #tpu.memory_space<vmem>>, %arg2: memref<11x32xf32, #tpu.memory_space<vmem>>, %arg3: memref<8x32xf32, #tpu.memory_space<vmem>>) attributes {dimension_semantics = [#tpu.dimension_semantics<parallel>], iteration_bounds = array<i64: 1>, scalar_prefetch = 0 : i64, scratch_operands = 0 : i64, tpu.core_type = #tpu.core_type<tc>, window_params = [{transform_indices = @transform_0, window_bounds = array<i64: 8, 1>}, {pipeline_mode = #tpu.pipeline_mode<synchronous>, transform_indices = @transform_1, window_bounds = array<i64: 11, 32>}, {transform_indices = @transform_2, window_bounds = array<i64: 8, 32>}]} {
    %0 = tpu.iota {dimensions = array<i32: 1>} : vector<8x11xi32>
    %c0 = arith.constant 0 : index
    %c0_0 = arith.constant 0 : index
    %1 = vector.load %arg1[%c0, %c0_0] : memref<8x1xi32, #tpu.memory_space<vmem>>, vector<8x1xi32>
    %2 = vector.broadcast %1 : vector<8x1xi32> to vector<8x11xi32>
    %3 = arith.cmpi eq, %2, %0 : vector<8x11xi32>
    %4 = arith.extui %3 : vector<8x11xi1> to vector<8x11xi32>
    %5 = arith.sitofp %4 : vector<8x11xi32> to vector<8x11xf32>
    %c0_1 = arith.constant 0 : index
    %c0_2 = arith.constant 0 : index
    %6 = vector.load %arg2[%c0_1, %c0_2] : memref<11x32xf32, #tpu.memory_space<vmem>>, vector<11x32xf32>
    %cst = arith.constant dense<0.000000e+00> : vector<8x32xf32>
    %7 = tpu.matmul %5, %6, %cst {dimension_numbers = #tpu.dot_dimension_numbers<[1], [0], [0], [1], [0, 0, 1, 1], [], []>} : vector<8x11xf32>, vector<11x32xf32>, vector<8x32xf32> -> vector<8x32xf32>
    %c0_3 = arith.constant 0 : index
    %c0_4 = arith.constant 0 : index
    %8 = vector.load %arg3[%c0_3, %c0_4] : memref<8x32xf32, #tpu.memory_space<vmem>>, vector<8x32xf32>
    tpu.vector_store %arg3[%c0_3, %c0_4], %7 {strides = array<i32>} : memref<8x32xf32, #tpu.memory_space<vmem>>, vector<8x32xf32>,
    return
  }
  func.func @transform_0(%arg0: i32) -> (i32, i32) {
    %c0_i32 = arith.constant 0 : i32
    %c0_i32_0 = arith.constant 0 : i32
    return %arg0, %c0_i32 : i32, i32
  }
  func.func @transform_1(%arg0: i32) -> (i32, i32) {
    %c0_i32 = arith.constant 0 : i32
    %c0_i32_0 = arith.constant 0 : i32
    %c0_i32_1 = arith.constant 0 : i32
    return %c0_i32, %c0_i32_0 : i32, i32
  }
  func.func @transform_2(%arg0: i32) -> (i32, i32) {
    %c0_i32 = arith.constant 0 : i32
    %c0_i32_0 = arith.constant 0 : i32
    return %arg0, %c0_i32 : i32, i32
  }
}

</mosaic_0001>

<llo_original>
// kernel: tpu_custom_call.1
$region0: #{tpu_custom_call.1}
  #allocation0 [shape = 'u32[]', space=smem, size = 0x4, offset = 0x4, fixed_abs, tag = 'smem constant byte address 0x4 - core index']
  #allocation1 [shape = 'u32[144,128]{1,0:T(1,128)}', space=vmem, size = 0x12000, scoped, tag = 'internal scratch']
  %s0 = inlined_call_operand.vmem [shape: s32[8,1], index: 0, kind: input, shape index: {}]
  %s1 = inlined_call_operand.hbm [shape: f32[11,32], index: 1, kind: input, shape index: {}]
  %s2 = inlined_call_operand.hbm [shape: f32[8,32], index: 2, kind: output, shape index: {}]
  %s3 = sld [smem:[#allocation0]]
  $region22: #{tpu_custom_call.1} parent=0
    _
  %s5 = ssub.s32 1, %s3
  %s6 = scalar_select 0, %s5, %s3
  $region1: #{tpu_custom_call.1} parent=0
    #allocation2 [shape = 'u8[8192]{0}', space=vmem, size = 0x2000, scoped, tag = 'input window, operand 1, single buffered']
    #allocation3 [shape = 's32[1]{0}', space=sflag, size = 0x4, scoped, tag = 'scoped memory for tpu_custom_call.1']
    #allocation4 [shape = 's32[1]{0}', space=sflag, size = 0x4, scoped, tag = 'scoped memory for tpu_custom_call.1']
    #allocation5 [shape = 'u8[4096]{0}', space=vmem, size = 0x1000, scoped, tag = 'output window, operand 0, single buffered']
    %7 = vsyncpa [#allocation3], 0
    %8 = vsyncpa [#allocation4], 0
    // Predicated region
    $region2: #{tpu_custom_call.1} parent=1 // pred_check
      _
    $region3: #{tpu_custom_call.1} parent=1 // pred_check_branch
      %10 = sbr.rel (0) target = $region5
    $region4: #{tpu_custom_call.1} parent=1 // pred_region
      _
    $region5: #{tpu_custom_call.1} parent=1 // pred_fallthru
      _
    // Predicated region
    $region6: #{tpu_custom_call.1} parent=1 // pred_check
      _
    $region7: #{tpu_custom_call.1} parent=1 // pred_check_branch
      %12 = sbr.rel (0) target = $region9
    $region8: #{tpu_custom_call.1} parent=1 // pred_region
      %s14 = ssub.s32 256, 256
      %15 = vsyncadd [#allocation3], %s14
      %s16 = sshll.u32 [#allocation2], 4
      %s17 = int_to_ptr.vmem [resolvable:$true] %s16
      %22 = dma.hbm_to_vmem [thread:$0]  %s1, 256, %s17, [#allocation3], 128, 128, 8
    $region9: #{tpu_custom_call.1} parent=1 // pred_fallthru
      _
    // Predicated region
    $region10: #{tpu_custom_call.1} parent=1 // pred_check
      _
    $region11: #{tpu_custom_call.1} parent=1 // pred_check_branch
      %24 = sbr.rel (0) target = $region13
    $region12: #{tpu_custom_call.1} parent=1 // pred_region
      %25 = dma.done [#allocation3], 256
    $region13: #{tpu_custom_call.1} parent=1 // pred_fallthru
      _
    %v26 = vlaneseq
    %v27 = vand.u32 %v26, 127
    %v28 = vld [vmem:[%s0] sm:$0xff]
    %29 = vset.pattern.permute.xlu0 0
    %30 = vperm.xlu0 %29, %v28
    %v31 = vpop.permute.xlu0 %30
    %vm32 = vcmp.eq.s32.totalorder %v31, %v27
    %v33 = vsel %vm32, 1, 0
    %v34 = vcvt.s32.f32 %v33
    %v35 = vld [vmem:[#allocation2] sm:$0xff]
    %v36 = vld [vmem:[#allocation2 + $0x8] sm:$0x7]
    %vm37 = vcmask 89088
    %v39 = vsel %vm37, %v34, 0
    %vm41 = vcmask 1042432
    %v43 = vsel %vm41, %v36, 0
    %45 = vmatprep.subr.mxu0 0.0
    %46 = vmatpush1.msra.mxu0 0.0
    %47 = vmatprep.subr.mxu0 0.0
    %48 = vmatpush1.msra.mxu0 0.0
    %49 = vmatprep.subr.mxu0 0.0
    %50 = vmatpush1.msra.mxu0 0.0
    %51 = vmatprep.subr.mxu0 0.0
    %52 = vmatpush1.msra.mxu0 0.0
    %53 = vmatprep.subr.mxu0 0.0
    %54 = vmatpush1.msra.mxu0 0.0
    %55 = vmatprep.subr.mxu0 0.0
    %56 = vmatpush1.msra.mxu0 0.0
    %57 = vmatprep.subr.mxu0 0.0
    %58 = vmatpush1.msra.mxu0 0.0
    %59 = vmatprep.subr.mxu0 0.0
    %60 = vmatpush1.msra.mxu0 0.0
    %61 = vmatprep.subr.mxu0 0.0
    %62 = vmatpush1.msra.mxu0 0.0
    %63 = vmatprep.subr.mxu0 0.0
    %64 = vmatpush1.msra.mxu0 0.0
    %65 = vmatprep.subr.mxu0 0.0
    %66 = vmatpush1.msra.mxu0 0.0
    %67 = vmatprep.subr.mxu0 0.0
    %68 = vmatpush1.msra.mxu0 0.0
    %69 = vmatprep.subr.mxu0 0.0
    %70 = vmatpush1.msra.mxu0 0.0
    %71 = vmatprep.subr.mxu0 0.0
    %72 = vmatpush1.msra.mxu0 0.0
    %73 = vmatprep.subr.mxu0 0.0
    %74 = vmatpush1.msra.mxu0 %v43
    %75 = vmatprep.subr.mxu0 0.0
    %76 = vmatpush1.msra.mxu0 %v35
    %77 = vmatprep.subr.mxu0 0.0
    %78 = vmatpush2.msra.mxu0 0.0
    %79 = vmatprep.subr.mxu0 0.0
    %80 = vmatpush2.msra.mxu0 0.0
    %81 = vmatprep.subr.mxu0 0.0
    %82 = vmatpush2.msra.mxu0 0.0
    %83 = vmatprep.subr.mxu0 0.0
    %84 = vmatpush2.msra.mxu0 0.0
    %85 = vmatprep.subr.mxu0 0.0
    %86 = vmatpush2.msra.mxu0 0.0
    %87 = vmatprep.subr.mxu0 0.0
    %88 = vmatpush2.msra.mxu0 0.0
    %89 = vmatprep.subr.mxu0 0.0
    %90 = vmatpush2.msra.mxu0 0.0
    %91 = vmatprep.subr.mxu0 0.0
    %92 = vmatpush2.msra.mxu0 0.0
    %93 = vmatprep.subr.mxu0 0.0
    %94 = vmatpush2.msra.mxu0 0.0
    %95 = vmatprep.subr.mxu0 0.0
    %96 = vmatpush2.msra.mxu0 0.0
    %97 = vmatprep.subr.mxu0 0.0
    %98 = vmatpush2.msra.mxu0 0.0
    %99 = vmatprep.subr.mxu0 0.0
    %100 = vmatpush2.msra.mxu0 0.0
    %101 = vmatprep.subr.mxu0 0.0
    %102 = vmatpush2.msra.mxu0 0.0
    %103 = vmatprep.subr.mxu0 0.0
    %104 = vmatpush2.msra.mxu0 0.0
    %105 = vmatprep.subr.mxu0 0.0
    %106 = vmatpush2.msra.mxu0 0.0
    %107 = vmatprep.subr.mxu0 0.0
    %108 = vmatpush2.msra.mxu0 0.0
    %109 = vmatprep.mubr.f32.mxu0 0.0
    %110 = vmatmul.mubr.f32.gmra.mxu0 %v39
    %v111 = vpop.f32.mrf.mxu0
    %v112 = vadd.f32 0.0, %v111
    %v113 = vpop.f32.mrf.mxu0
    %114 = vdwg.mxu0
    %vm115 = vcmask 261120
    %116 = vst.msk [vmem:[#allocation5] sm:$0xff] %vm115, %v112
    // Predicated region
    $region14: #{tpu_custom_call.1} parent=1 // pred_check
      _
    $region15: #{tpu_custom_call.1} parent=1 // pred_check_branch
      %118 = sbr.rel (0) target = $region17
    $region16: #{tpu_custom_call.1} parent=1 // pred_region
      %s120 = ssub.s32 128, 128
      %121 = vsyncadd [#allocation4], %s120
      %s123 = sshll.u32 [#allocation5], 4
      %s124 = int_to_ptr.vmem [resolvable:$true] %s123
      %126 = dma.vmem_to_hbm [thread:$0]  %s124, 128, %s2, [#allocation4]
    $region17: #{tpu_custom_call.1} parent=1 // pred_fallthru
      _
    // Predicated region
    $region18: #{tpu_custom_call.1} parent=1 // pred_check
      _
    $region19: #{tpu_custom_call.1} parent=1 // pred_check_branch
      %128 = sbr.rel (0) target = $region21
    $region20: #{tpu_custom_call.1} parent=1 // pred_region
      %129 = dma.done [#allocation4], 128
    $region21: #{tpu_custom_call.1} parent=1 // pred_fallthru
      _
    %130 = vsyncpa [#allocation3], 1
    %131 = vsyncpa [#allocation4], 1

</llo_original>
